<compile_context>
chip_gen: v6e
topology: v6e:2x2x1
jax: 0.10.0
libtpu: 0.0.40
codegen_flags: <defaults>
</compile_context>

<pallas_src>
import functools

import jax
import jax.numpy as jnp
from jax import lax
from jax.experimental import pallas as pl
from jax.experimental.pallas import tpu as pltpu


def _round_up(n: int, m: int) -> int:
    return ((n + m - 1) // m) * m


def autoencoder_kernel(x_ref, w_ref, alpha_ref, fbeta_ref, decb_ref,
                       encout_ref, decout_ref):
    x = x_ref[...]            # (TB, Dp)  matmul dtype (bf16)
    w = w_ref[...]            # (Dp, Hp)  matmul dtype (bf16), VMEM-resident
    alpha = alpha_ref[...]    # (1, Hp)   f32
    fbeta = fbeta_ref[...]    # (1, Hp)   f32  (= alpha*encb + beta)
    decb = decb_ref[...]      # (1, Dp)   f32

    # Encoder matmul (MXU, f32 accumulation) + fused trelu (VPU, f32).
    h = jnp.dot(x, w, preferred_element_type=jnp.float32)            # (TB, Hp)
    encout = jnp.maximum(alpha * h + fbeta, 0.0)                     # trelu

    # Tied decoder: contract on encw's last (H) axis -- no transpose of w.
    d = lax.dot_general(encout.astype(w.dtype), w,
                        dimension_numbers=(((1,), (1,)), ((), ())),
                        preferred_element_type=jnp.float32) + decb   # (TB, Dp)
    # sigmoid: exp on the EUP; reciprocal also routed to the EUP (approx vrcp).
    decout = pl.reciprocal(1.0 + jnp.exp(-d), approx=True)

    encout_ref[...] = encout.astype(encout_ref.dtype)
    decout_ref[...] = decout.astype(decout_ref.dtype)


@functools.partial(jax.jit, static_argnames=("block_b", "matmul_dtype"))
def autoencoder_forward(x, encw, encb, decb, alpha, beta, *,
                        block_b=512, matmul_dtype=jnp.bfloat16):
    B, D = x.shape
    D2, H = encw.shape
    assert D2 == D

    LANE = 128
    f32 = jnp.float32
    Dp = _round_up(D, LANE)
    Hp = _round_up(H, LANE)
    TB = min(block_b, _round_up(B, 8))      # batch tile (>= 8 sublanes)
    Bp = _round_up(B, TB)
    n_tiles = Bp // TB

    # Host-side prep: lane-dense zero padding, bias folding, bf16 matmul casts.
    x_p = jnp.zeros((Bp, Dp), matmul_dtype).at[:B, :D].set(x.astype(matmul_dtype))
    w_p = jnp.zeros((Dp, Hp), matmul_dtype).at[:D, :H].set(encw.astype(matmul_dtype))
    alpha_p = jnp.zeros((1, Hp), f32).at[0, :H].set(alpha.astype(f32))
    fbeta_p = jnp.zeros((1, Hp), f32).at[0, :H].set((alpha * encb + beta).astype(f32))
    decb_p = jnp.zeros((1, Dp), f32).at[0, :D].set(decb.astype(f32))

    # VMEM budget: resident weight + param rows + double-buffered per-tile I/O.
    mm_bytes = jnp.dtype(matmul_dtype).itemsize
    vmem_need = (Dp * Hp * mm_bytes                  # resident weight
                 + 2 * TB * Dp * mm_bytes            # x in      (double-buffered)
                 + 2 * TB * Hp * 4                   # encout out (double-buffered)
                 + 2 * TB * Dp * 4                   # decout out (double-buffered)
                 + 2 * (2 * Hp + Dp) * 4)            # param rows
    vmem_limit = int(min(64 * 1024 * 1024,
                         max(32 * 1024 * 1024, 2 * vmem_need + (1 << 20))))

    enc_p, dec_p = pl.pallas_call(
        autoencoder_kernel,
        out_shape=(jax.ShapeDtypeStruct((Bp, Hp), f32),   # encout
                   jax.ShapeDtypeStruct((Bp, Dp), f32)),  # decout
        grid_spec=pltpu.PrefetchScalarGridSpec(
            num_scalar_prefetch=0,
            grid=(n_tiles,),
            in_specs=[
                pl.BlockSpec((TB, Dp), lambda i: (i, 0)),   # x       (per-tile)
                pl.BlockSpec((Dp, Hp), lambda i: (0, 0)),   # encw    (resident)
                pl.BlockSpec((1, Hp), lambda i: (0, 0)),    # alpha   (resident)
                pl.BlockSpec((1, Hp), lambda i: (0, 0)),    # fused beta
                pl.BlockSpec((1, Dp), lambda i: (0, 0)),    # decb
            ],
            out_specs=[
                pl.BlockSpec((TB, Hp), lambda i: (i, 0)),   # encout  (per-tile)
                pl.BlockSpec((TB, Dp), lambda i: (i, 0)),   # decout  (per-tile)
            ],
        ),
        compiler_params=pltpu.CompilerParams(
            dimension_semantics=("parallel",),
            vmem_limit_bytes=vmem_limit),
    )(x_p, w_p, alpha_p, fbeta_p, decb_p)

    # Strip host-side padding.
    return enc_p[:B, :H], dec_p[:B, :D]


def reference_forward(x, encw, encb, decb, alpha, beta,
                      matmul_dtype=jnp.float32):
    xm = x.astype(matmul_dtype)
    wm = encw.astype(matmul_dtype)
    h = jnp.dot(xm, wm, preferred_element_type=jnp.float32) + encb
    encout = jnp.maximum(alpha * h + beta, 0.0)
    d = jnp.dot(encout.astype(matmul_dtype), wm.T,
                preferred_element_type=jnp.float32) + decb
    decout = jax.nn.sigmoid(d)
    return encout, decout


if __name__ == "__main__":
    # Deterministic synthetic parameters (winit=False path: plain randn init).
    batch, input_dim, hidden_dim = 8, 16, 32
    key = jax.random.PRNGKey(0)
    kx, kw, ka, kb = jax.random.split(key, 4)

    x = jax.random.normal(kx, (batch, input_dim), dtype=jnp.float32)
    encw = jax.random.normal(kw, (input_dim, hidden_dim), dtype=jnp.float32)
    encb = jnp.zeros((hidden_dim,), dtype=jnp.float32)
    decb = jnp.zeros((input_dim,), dtype=jnp.float32)
    alpha = jax.random.normal(ka, (hidden_dim,), dtype=jnp.float32)
    beta = jax.random.normal(kb, (hidden_dim,), dtype=jnp.float32)

    encout, decout = autoencoder_forward(x, encw, encb, decb, alpha, beta)
    jax.block_until_ready((encout, decout))

    # Check 1 (tight): reference matching kernel matmul precision (bf16 MXU
    # inputs, f32 accumulation); remaining delta is only the approx reciprocal.
    ref_enc_m, ref_dec_m = reference_forward(
        x, encw, encb, decb, alpha, beta, matmul_dtype=jnp.bfloat16)
    assert jnp.allclose(encout, ref_enc_m, atol=1e-2, rtol=1e-2)
    assert jnp.allclose(decout, ref_dec_m, atol=1e-2, rtol=1e-2)

    # Check 2 (loose): pure-f32 reference -- semantics match within bf16 slop.
    ref_enc, ref_dec = reference_forward(x, encw, encb, decb, alpha, beta)
    assert jnp.allclose(encout, ref_enc, atol=1e-1, rtol=1e-1)
    assert jnp.allclose(decout, ref_dec, atol=1e-1, rtol=1e-1)

    print("KERNEL_OK")
</pallas_src>

<mosaic_0001>
module attributes {stable_mosaic.version = 11 : i64} {
  func.func @autoencoder_kernel(%arg0: i32, %arg1: memref<8x128xbf16, #tpu.memory_space<vmem>>, %arg2: memref<128x128xbf16, #tpu.memory_space<vmem>>, %arg3: memref<1x128xf32, #tpu.memory_space<vmem>>, %arg4: memref<1x128xf32, #tpu.memory_space<vmem>>, %arg5: memref<1x128xf32, #tpu.memory_space<vmem>>, %arg6: memref<8x128xf32, #tpu.memory_space<vmem>>, %arg7: memref<8x128xf32, #tpu.memory_space<vmem>>) attributes {dimension_semantics = [#tpu.dimension_semantics<parallel>], iteration_bounds = array<i64: 1>, scalar_prefetch = 0 : i64, scratch_operands = 0 : i64, tpu.core_type = #tpu.core_type<tc>, window_params = [{transform_indices = @transform_0, window_bounds = array<i64: 8, 128>}, {pipeline_mode = #tpu.pipeline_mode<synchronous>, transform_indices = @transform_1, window_bounds = array<i64: 128, 128>}, {pipeline_mode = #tpu.pipeline_mode<synchronous>, transform_indices = @transform_2, window_bounds = array<i64: 1, 128>}, {pipeline_mode = #tpu.pipeline_mode<synchronous>, transform_indices = @transform_3, window_bounds = array<i64: 1, 128>}, {pipeline_mode = #tpu.pipeline_mode<synchronous>, transform_indices = @transform_4, window_bounds = array<i64: 1, 128>}, {transform_indices = @transform_5, window_bounds = array<i64: 8, 128>}, {transform_indices = @transform_6, window_bounds = array<i64: 8, 128>}]} {
    %c0 = arith.constant 0 : index
    %c0_0 = arith.constant 0 : index
    %0 = vector.load %arg1[%c0, %c0_0] : memref<8x128xbf16, #tpu.memory_space<vmem>>, vector<8x128xbf16>
    %c0_1 = arith.constant 0 : index
    %c0_2 = arith.constant 0 : index
    %1 = vector.load %arg2[%c0_1, %c0_2] : memref<128x128xbf16, #tpu.memory_space<vmem>>, vector<128x128xbf16>
    %c0_3 = arith.constant 0 : index
    %c0_4 = arith.constant 0 : index
    %2 = vector.load %arg3[%c0_3, %c0_4] : memref<1x128xf32, #tpu.memory_space<vmem>>, vector<1x128xf32>
    %c0_5 = arith.constant 0 : index
    %c0_6 = arith.constant 0 : index
    %3 = vector.load %arg4[%c0_5, %c0_6] : memref<1x128xf32, #tpu.memory_space<vmem>>, vector<1x128xf32>
    %c0_7 = arith.constant 0 : index
    %c0_8 = arith.constant 0 : index
    %4 = vector.load %arg5[%c0_7, %c0_8] : memref<1x128xf32, #tpu.memory_space<vmem>>, vector<1x128xf32>
    %cst = arith.constant dense<0.000000e+00> : vector<8x128xf32>
    %5 = tpu.matmul %0, %1, %cst {dimension_numbers = #tpu.dot_dimension_numbers<[1], [0], [0], [1], [0, 0, 1, 1], [], []>} : vector<8x128xbf16>, vector<128x128xbf16>, vector<8x128xf32> -> vector<8x128xf32>
    %6 = vector.broadcast %2 : vector<1x128xf32> to vector<8x128xf32>
    %7 = arith.mulf %6, %5 : vector<8x128xf32>
    %8 = vector.broadcast %3 : vector<1x128xf32> to vector<8x128xf32>
    %9 = arith.addf %7, %8 : vector<8x128xf32>
    %cst_9 = arith.constant 0.000000e+00 : f32
    %10 = vector.broadcast %cst_9 : f32 to vector<8x128xf32>
    %11 = arith.maximumf %9, %10 : vector<8x128xf32>
    %12 = arith.truncf %11 : vector<8x128xf32> to vector<8x128xbf16>
    %cst_10 = arith.constant dense<0.000000e+00> : vector<8x128xf32>
    %13 = tpu.matmul %12, %1, %cst_10 {dimension_numbers = #tpu.dot_dimension_numbers<[1], [1], [0], [0], [0, 0, 1, 0], [], []>} : vector<8x128xbf16>, vector<128x128xbf16>, vector<8x128xf32> -> vector<8x128xf32>
    %14 = vector.broadcast %4 : vector<1x128xf32> to vector<8x128xf32>
    %15 = arith.addf %13, %14 : vector<8x128xf32>
    %cst_11 = arith.constant 0.000000e+00 : f32
    %16 = vector.broadcast %cst_11 : f32 to vector<8x128xf32>
    %17 = arith.subf %16, %15 : vector<8x128xf32>
    %18 = math.exp %17 : vector<8x128xf32>
    %cst_12 = arith.constant 1.000000e+00 : f32
    %19 = vector.broadcast %cst_12 : f32 to vector<8x128xf32>
    %20 = arith.addf %19, %18 : vector<8x128xf32>
    %21 = tpu.reciprocal %20 {approx = true} : vector<8x128xf32> -> vector<8x128xf32>
    %c0_13 = arith.constant 0 : index
    %c0_14 = arith.constant 0 : index
    %22 = vector.load %arg6[%c0_13, %c0_14] : memref<8x128xf32, #tpu.memory_space<vmem>>, vector<8x128xf32>
    tpu.vector_store %arg6[%c0_13, %c0_14], %11 {strides = array<i32>} : memref<8x128xf32, #tpu.memory_space<vmem>>, vector<8x128xf32>,
    %c0_15 = arith.constant 0 : index
    %c0_16 = arith.constant 0 : index
    %23 = vector.load %arg7[%c0_15, %c0_16] : memref<8x128xf32, #tpu.memory_space<vmem>>, vector<8x128xf32>
    tpu.vector_store %arg7[%c0_15, %c0_16], %21 {strides = array<i32>} : memref<8x128xf32, #tpu.memory_space<vmem>>, vector<8x128xf32>,
    return
  }
  func.func @transform_0(%arg0: i32) -> (i32, i32) {
    %c0_i32 = arith.constant 0 : i32
    %c0_i32_0 = arith.constant 0 : i32
    return %arg0, %c0_i32 : i32, i32
  }
  func.func @transform_1(%arg0: i32) -> (i32, i32) {
    %c0_i32 = arith.constant 0 : i32
    %c0_i32_0 = arith.constant 0 : i32
    %c0_i32_1 = arith.constant 0 : i32
    return %c0_i32, %c0_i32_0 : i32, i32
  }
  func.func @transform_2(%arg0: i32) -> (i32, i32) {
    %c0_i32 = arith.constant 0 : i32
    %c0_i32_0 = arith.constant 0 : i32
    %c0_i32_1 = arith.constant 0 : i32
    return %c0_i32, %c0_i32_0 : i32, i32
  }
  func.func @transform_3(%arg0: i32) -> (i32, i32) {
    %c0_i32 = arith.constant 0 : i32
    %c0_i32_0 = arith.constant 0 : i32
    %c0_i32_1 = arith.constant 0 : i32
    return %c0_i32, %c0_i32_0 : i32, i32
  }
  func.func @transform_4(%arg0: i32) -> (i32, i32) {
    %c0_i32 = arith.constant 0 : i32
    %c0_i32_0 = arith.constant 0 : i32
    %c0_i32_1 = arith.constant 0 : i32
    return %c0_i32, %c0_i32_0 : i32, i32
  }
  func.func @transform_5(%arg0: i32) -> (i32, i32) {
    %c0_i32 = arith.constant 0 : i32
    %c0_i32_0 = arith.constant 0 : i32
    return %arg0, %c0_i32 : i32, i32
  }
  func.func @transform_6(%arg0: i32) -> (i32, i32) {
    %c0_i32 = arith.constant 0 : i32
    %c0_i32_0 = arith.constant 0 : i32
    return %arg0, %c0_i32 : i32, i32
  }
}

</mosaic_0001>

<llo_original>
// kernel: autoencoder_forward.1
$region0: #{autoencoder_forward.1}
  #allocation0 [shape = 'u32[]', space=smem, size = 0x4, offset = 0x4, fixed_abs, tag = 'smem constant byte address 0x4 - core index']
  #allocation1 [shape = 'u32[144,128]{1,0:T(1,128)}', space=vmem, size = 0x12000, scoped, tag = 'internal scratch']
  %s0 = inlined_call_operand.vmem [shape: bf16[8,128], index: 0, kind: input, shape index: {}]
  %s1 = inlined_call_operand.vmem [shape: bf16[128,128], index: 1, kind: input, shape index: {}]
  %s2 = inlined_call_operand.vmem [shape: f32[1,128], index: 2, kind: input, shape index: {}]
  %s3 = inlined_call_operand.vmem [shape: f32[1,128], index: 3, kind: input, shape index: {}]
  %s4 = inlined_call_operand.vmem [shape: f32[1,128], index: 4, kind: input, shape index: {}]
  %s5 = inlined_call_operand.hbm [shape: f32[8,128], index: 5, kind: output, shape index: {0}]
  %s6 = inlined_call_operand.hbm [shape: f32[8,128], index: 6, kind: output, shape index: {1}]
  %7 = xla_tuple %s5, %s6
  %s8 = sld [smem:[#allocation0]]
  $region38: #{autoencoder_forward.1} parent=0
    _
  %s10 = ssub.s32 1, %s8
  %s11 = scalar_select 0, %s10, %s8
  $region1: #{autoencoder_forward.1} parent=0
    #allocation2 [shape = 'u8[4096]{0}', space=vmem, size = 0x1000, scoped, tag = 'output window, operand 0, single buffered']
    #allocation3 [shape = 's32[1]{0}', space=sflag, size = 0x4, scoped, tag = 'scoped memory for autoencoder_forward.1']
    #allocation4 [shape = 'u8[4096]{0}', space=vmem, size = 0x1000, scoped, tag = 'output window, operand 1, single buffered']
    #allocation5 [shape = 's32[1]{0}', space=sflag, size = 0x4, scoped, tag = 'scoped memory for autoencoder_forward.1']
    %12 = vsyncpa [#allocation3], 0
    %13 = vsyncpa [#allocation5], 0
    // Predicated region
    $region2: #{autoencoder_forward.1} parent=1 // pred_check
      _
    $region3: #{autoencoder_forward.1} parent=1 // pred_check_branch
      %15 = sbr.rel (0) target = $region5
    $region4: #{autoencoder_forward.1} parent=1 // pred_region
      _
    $region5: #{autoencoder_forward.1} parent=1 // pred_fallthru
      _
    // Predicated region
    $region6: #{autoencoder_forward.1} parent=1 // pred_check
      _
    $region7: #{autoencoder_forward.1} parent=1 // pred_check_branch
      %17 = sbr.rel (0) target = $region9
    $region8: #{autoencoder_forward.1} parent=1 // pred_region
      _
    $region9: #{autoencoder_forward.1} parent=1 // pred_fallthru
      _
    // Predicated region
    $region10: #{autoencoder_forward.1} parent=1 // pred_check
      _
    $region11: #{autoencoder_forward.1} parent=1 // pred_check_branch
      %19 = sbr.rel (0) target = $region13
    $region12: #{autoencoder_forward.1} parent=1 // pred_region
      _
    $region13: #{autoencoder_forward.1} parent=1 // pred_fallthru
      _
    // Predicated region
    $region14: #{autoencoder_forward.1} parent=1 // pred_check
      _
    $region15: #{autoencoder_forward.1} parent=1 // pred_check_branch
      %21 = sbr.rel (0) target = $region17
    $region16: #{autoencoder_forward.1} parent=1 // pred_region
      _
    $region17: #{autoencoder_forward.1} parent=1 // pred_fallthru
      _
    // Predicated region
    $region18: #{autoencoder_forward.1} parent=1 // pred_check
      _
    $region19: #{autoencoder_forward.1} parent=1 // pred_check_branch
      %23 = sbr.rel (0) target = $region21
    $region20: #{autoencoder_forward.1} parent=1 // pred_region
      _
    $region21: #{autoencoder_forward.1} parent=1 // pred_fallthru
      _
    %v25 = vld [vmem:[%s0] sm:$0xf]
    %v26 = vld [vmem:[%s1] sm:$0xf]
    %v27 = vld [vmem:[%s1 + $0x4] sm:$0xf]
    %v28 = vld [vmem:[%s1 + $0x8] sm:$0xf]
    %v29 = vld [vmem:[%s1 + $0xc] sm:$0xf]
    %v30 = vld [vmem:[%s1 + $0x10] sm:$0xf]
    %v31 = vld [vmem:[%s1 + $0x14] sm:$0xf]
    %v32 = vld [vmem:[%s1 + $0x18] sm:$0xf]
    %v33 = vld [vmem:[%s1 + $0x1c] sm:$0xf]
    %v34 = vld [vmem:[%s1 + $0x20] sm:$0xf]
    %v35 = vld [vmem:[%s1 + $0x24] sm:$0xf]
    %v36 = vld [vmem:[%s1 + $0x28] sm:$0xf]
    %v37 = vld [vmem:[%s1 + $0x2c] sm:$0xf]
    %v38 = vld [vmem:[%s1 + $0x30] sm:$0xf]
    %v39 = vld [vmem:[%s1 + $0x34] sm:$0xf]
    %v40 = vld [vmem:[%s1 + $0x38] sm:$0xf]
    %v41 = vld [vmem:[%s1 + $0x3c] sm:$0xf]
    %v42 = vld [vmem:[%s2] sm:$0x1]
    %v43 = vld [vmem:[%s3] sm:$0x1]
    %v44 = vld [vmem:[%s4] sm:$0x1]
    %v61 = vunpack.c.l.b16 %v26
    %v62 = vunpack.c.l.b16 %v27
    %v63 = vunpack.c.l.b16 %v28
    %v64 = vunpack.c.l.b16 %v29
    %v65 = vunpack.c.l.b16 %v30
    %v66 = vunpack.c.l.b16 %v31
    %v67 = vunpack.c.l.b16 %v32
    %v68 = vunpack.c.l.b16 %v33
    %v69 = vunpack.c.l.b16 %v34
    %v70 = vunpack.c.l.b16 %v35
    %v71 = vunpack.c.l.b16 %v36
    %v72 = vunpack.c.l.b16 %v37
    %v73 = vunpack.c.l.b16 %v38
    %v74 = vunpack.c.l.b16 %v39
    %v75 = vunpack.c.l.b16 %v40
    %v76 = vunpack.c.l.b16 %v41
    %v77 = vpack.c.b16 %v62, %v61
    %v78 = vpack.c.b16 %v64, %v63
    %v79 = vpack.c.b16 %v66, %v65
    %v80 = vpack.c.b16 %v68, %v67
    %v81 = vpack.c.b16 %v70, %v69
    %v82 = vpack.c.b16 %v72, %v71
    %v83 = vpack.c.b16 %v74, %v73
    %v84 = vpack.c.b16 %v76, %v75
    %93 = vmatprep.subr.bf16.mxu0 0
    %94 = vmatpush1.bf16.msra.mxu0 %v84
    %95 = vmatprep.subr.bf16.mxu0 0
    %96 = vmatpush1.bf16.msra.mxu0 %v83
    %97 = vmatprep.subr.bf16.mxu0 0
    %98 = vmatpush1.bf16.msra.mxu0 %v82
    %99 = vmatprep.subr.bf16.mxu0 0
    %100 = vmatpush1.bf16.msra.mxu0 %v81
    %101 = vmatprep.subr.bf16.mxu0 0
    %102 = vmatpush1.bf16.msra.mxu0 %v80
    %103 = vmatprep.subr.bf16.mxu0 0
    %104 = vmatpush1.bf16.msra.mxu0 %v79
    %105 = vmatprep.subr.bf16.mxu0 0
    %106 = vmatpush1.bf16.msra.mxu0 %v78
    %107 = vmatprep.subr.bf16.mxu0 0
    %108 = vmatpush1.bf16.msra.mxu0 %v77
    %109 = vmatprep.subr.bf16.mxu0 0
    %110 = vmatpush2.bf16.msra.mxu0 0
    %111 = vmatprep.subr.bf16.mxu0 0
    %112 = vmatpush2.bf16.msra.mxu0 0
    %113 = vmatprep.subr.bf16.mxu0 0
    %114 = vmatpush2.bf16.msra.mxu0 0
    %115 = vmatprep.subr.bf16.mxu0 0
    %116 = vmatpush2.bf16.msra.mxu0 0
    %117 = vmatprep.subr.bf16.mxu0 0
    %118 = vmatpush2.bf16.msra.mxu0 0
    %119 = vmatprep.subr.bf16.mxu0 0
    %120 = vmatpush2.bf16.msra.mxu0 0
    %121 = vmatprep.subr.bf16.mxu0 0
    %122 = vmatpush2.bf16.msra.mxu0 0
    %123 = vmatprep.subr.bf16.mxu0 0
    %124 = vmatpush2.bf16.msra.mxu0 0
    %125 = vmatprep.mubr.bf16.mxu0 0
    %126 = vmatmul.mubr.bf16.gmra.mxu0 %v25
    %v127 = vpop.f32.mrf.mxu0
    %v128 = vadd.f32 0.0, %v127
    %v129 = vpop.f32.mrf.mxu0
    %v130 = vpop.f32.mrf.mxu0
    %v131 = vpop.f32.mrf.mxu0
    %132 = vdwg.mxu0
    %v134 = vlaneseq
    %v135 = vshrl.u32 %v134, 7
    %v136 = vsub.s32 0, %v135
    %v137 = vrot.slane %v42, %v136
    %v139 = vmul.f32 %v137, %v128
    %v141 = vlaneseq
    %v142 = vshrl.u32 %v141, 7
    %v143 = vsub.s32 0, %v142
    %v144 = vrot.slane %v43, %v143
    %v146 = vadd.f32 %v139, %v144
    %v147 = vmax.f32 %v146, 0.0
    %v148 = vpack.c.bf16 %v147, %v147
    %v150 = vlaneseq
    %v151 = vshrl.u32 %v150, 7
    %v152 = vsub.s32 0, %v151
    %v153 = vrot.slane %v44, %v152
    %155 = vmatprep.subr.bf16.mxu0 0
    %156 = vmatpush1.bf16.xpose.msra.mxu0 %v84
    %157 = vmatprep.subr.bf16.mxu0 0
    %158 = vmatpush1.bf16.xpose.msra.mxu0 %v83
    %159 = vmatprep.subr.bf16.mxu0 0
    %160 = vmatpush1.bf16.xpose.msra.mxu0 %v82
    %161 = vmatprep.subr.bf16.mxu0 0
    %162 = vmatpush1.bf16.xpose.msra.mxu0 %v81
    %163 = vmatprep.subr.bf16.mxu0 0
    %164 = vmatpush1.bf16.xpose.msra.mxu0 %v80
    %165 = vmatprep.subr.bf16.mxu0 0
    %166 = vmatpush1.bf16.xpose.msra.mxu0 %v79
    %167 = vmatprep.subr.bf16.mxu0 0
    %168 = vmatpush1.bf16.xpose.msra.mxu0 %v78
    %169 = vmatprep.subr.bf16.mxu0 0
    %170 = vmatpush1.bf16.xpose.msra.mxu0 %v77
    %171 = vmatprep.subr.bf16.mxu0 0
    %172 = vmatpush2.bf16.xpose.msra.mxu0 0
    %173 = vmatprep.subr.bf16.mxu0 0
    %174 = vmatpush2.bf16.xpose.msra.mxu0 0
    %175 = vmatprep.subr.bf16.mxu0 0
    %176 = vmatpush2.bf16.xpose.msra.mxu0 0
    %177 = vmatprep.subr.bf16.mxu0 0
    %178 = vmatpush2.bf16.xpose.msra.mxu0 0
    %179 = vmatprep.subr.bf16.mxu0 0
    %180 = vmatpush2.bf16.xpose.msra.mxu0 0
    %181 = vmatprep.subr.bf16.mxu0 0
    %182 = vmatpush2.bf16.xpose.msra.mxu0 0
    %183 = vmatprep.subr.bf16.mxu0 0
    %184 = vmatpush2.bf16.xpose.msra.mxu0 0
    %185 = vmatprep.subr.bf16.mxu0 0
    %186 = vmatpush2.bf16.xpose.msra.mxu0 0
    %187 = vmatprep.mubr.bf16.mxu0 0
    %188 = vmatmul.mubr.bf16.gmra.mxu0 %v148
    %v189 = vpop.f32.mrf.mxu0
    %v190 = vadd.f32 %v153, %v189
    %v191 = vpop.f32.mrf.mxu0
    %v192 = vpop.f32.mrf.mxu0
    %v193 = vpop.f32.mrf.mxu0
    %194 = vdwg.mxu0
    %v195 = vsub.f32 0.0, %v190
    %v196 = vmul.f32 %v195, 1.442695
    %v197 = vpow.pop %v196
    %v198 = vadd.f32 %v197, 1.0
    %v199 = vrcp.pop %v198
    %200 = vst [vmem:[#allocation2] sm:$0xff] %v147
    %201 = vst [vmem:[#allocation4] sm:$0xff] %v199
    // Predicated region
    $region22: #{autoencoder_forward.1} parent=1 // pred_check
      _
    $region23: #{autoencoder_forward.1} parent=1 // pred_check_branch
      %203 = sbr.rel (0) target = $region25
    $region24: #{autoencoder_forward.1} parent=1 // pred_region
      %s205 = ssub.s32 128, 128
      %206 = vsyncadd [#allocation3], %s205
      %s208 = sshll.u32 [#allocation2], 4
      %s209 = int_to_ptr.vmem [resolvable:$true] %s208
      %211 = dma.vmem_to_hbm [thread:$0]  %s209, 128, %s5, [#allocation3]
    $region25: #{autoencoder_forward.1} parent=1 // pred_fallthru
      _
    // Predicated region
    $region26: #{autoencoder_forward.1} parent=1 // pred_check
      _
    $region27: #{autoencoder_forward.1} parent=1 // pred_check_branch
      %213 = sbr.rel (0) target = $region29
    $region28: #{autoencoder_forward.1} parent=1 // pred_region
      %s215 = ssub.s32 128, 128
      %216 = vsyncadd [#allocation5], %s215
      %s218 = sshll.u32 [#allocation4], 4
      %s219 = int_to_ptr.vmem [resolvable:$true] %s218
      %221 = dma.vmem_to_hbm [thread:$0]  %s219, 128, %s6, [#allocation5]
    $region29: #{autoencoder_forward.1} parent=1 // pred_fallthru
      _
    // Predicated region
    $region30: #{autoencoder_forward.1} parent=1 // pred_check
      _
    $region31: #{autoencoder_forward.1} parent=1 // pred_check_branch
      %223 = sbr.rel (0) target = $region33
    $region32: #{autoencoder_forward.1} parent=1 // pred_region
      %224 = dma.done [#allocation3], 128
    $region33: #{autoencoder_forward.1} parent=1 // pred_fallthru
      _
    // Predicated region
    $region34: #{autoencoder_forward.1} parent=1 // pred_check
      _
    $region35: #{autoencoder_forward.1} parent=1 // pred_check_branch
      %226 = sbr.rel (0) target = $region37
    $region36: #{autoencoder_forward.1} parent=1 // pred_region
      %227 = dma.done [#allocation5], 128
    $region37: #{autoencoder_forward.1} parent=1 // pred_fallthru
      _
    %228 = vsyncpa [#allocation3], 1
    %229 = vsyncpa [#allocation5], 1

</llo_original>
